<compile_context>
chip_gen: v6e
topology: v6e:2x2x1
jax: 0.10.0
libtpu: 0.0.40
codegen_flags: <defaults>
</compile_context>

<pallas_src>
import functools
import math

import jax
import jax.numpy as jnp
from jax.experimental import pallas as pl
from jax.experimental.pallas import tpu as pltpu


def _round_up(v, m):
    return (v + m - 1) // m * m


def _cdiv(a, b):
    return (a + b - 1) // b


# ---------------------------------------------------------------------------
# VMEM budgeting (per generation: 128 MiB on v5e/v6e, 64 MiB on v7x).
# ---------------------------------------------------------------------------
def _vmem_budget():
    try:
        cap = int(pltpu.get_tpu_info().vmem_capacity_bytes)
    except Exception:
        cap = 64 * 1024 * 1024  # conservative default (v7x-sized)
    limit = int(min(cap, 128 * 1024 * 1024)) * 3 // 4   # requested scoped-VMEM limit
    budget = limit * 2 // 3                              # what our blocks may consume
    return limit, budget


def _pick_row_tile(per_row_bytes, fixed_bytes, budget, max_rows=1024):
    tile = max_rows
    while tile > 8 and fixed_bytes + tile * per_row_bytes > budget:
        tile //= 2
    return max(tile, 8)


def _const_spec(block_shape, index_map, single_buffer):
    # Constant-index operands (weight / bias) gain nothing from double
    # buffering; request a single buffer to free VMEM for bigger row tiles.
    if single_buffer:
        return pl.BlockSpec(block_shape, index_map, pipeline_mode=pl.Buffered(1))
    return pl.BlockSpec(block_shape, index_map)


def _call_with_const_fallback(build, operands):
    # Try single-buffered constant operands first; fall back to the default
    # (double-buffered) specs if this JAX/Mosaic version rejects Buffered(1).
    try:
        return build(True)(*operands)
    except Exception:
        return build(False)(*operands)


# ---------------------------------------------------------------------------
# Fused bias/activation epilogue (shared by both kernels).
# ---------------------------------------------------------------------------
def _activation(y, af, channel_softmax, c_out):
    if af == "relu":
        return jnp.maximum(y, 0.0)
    if af == "tanh":
        return jnp.tanh(y)
    if af == "sigmoid":
        return jax.nn.sigmoid(y)
    if af == "softmax" and channel_softmax:
        if c_out != y.shape[-1]:
            # Mask the lane-padding columns so they don't pollute the softmax.
            col = jax.lax.broadcasted_iota(jnp.int32, y.shape, y.ndim - 1)
            y = jnp.where(col < c_out, y, -jnp.inf)
        m = jnp.max(y, axis=-1, keepdims=True)
        e = jnp.exp(y - m)
        s = jnp.sum(e, axis=-1, keepdims=True)
        return e * pl.reciprocal(s, approx=True)  # EUP divide: effectively free
    return y


# ---------------------------------------------------------------------------
# Kernels.
# ---------------------------------------------------------------------------
def _conv1d_matmul_kernel(x_ref, w_ref, b_ref, o_ref, *, af, channel_softmax, c_out):
    # General path: one MXU matmul per row tile over the unfolded contraction.
    y = jnp.dot(x_ref[...], w_ref[...], preferred_element_type=jnp.float32)
    y = y + b_ref[...]
    y = _activation(y, af, channel_softmax, c_out)
    o_ref[...] = y.astype(o_ref.dtype)


def _conv1d_stride1_kernel(x_ref, h_ref, w_ref, b_ref, o_ref, *,
                           K, af, channel_softmax, c_out):
    # stride==1 path: unfold the K taps in VMEM from (main tile + halo rows).
    xm = x_ref[0].astype(jnp.float32)                 # (TILE_L, C_in)
    tile_l = xm.shape[0]
    if K > 1:
        hl = h_ref[0, 0].astype(jnp.float32)          # (K-1, C_in)
        window = jnp.concatenate([xm, hl], axis=0)    # (TILE_L + K - 1, C_in)
    else:
        window = xm
    y = jnp.zeros((tile_l, o_ref.shape[-1]), jnp.float32)
    for k in range(K):                                # K small & static: unrolled
        tap = window[k:k + tile_l, :].astype(w_ref.dtype)
        y = y + jnp.dot(tap, w_ref[k], preferred_element_type=jnp.float32)
    y = y + b_ref[...]
    y = _activation(y, af, channel_softmax, c_out)
    o_ref[0] = y.astype(o_ref.dtype)


# ---------------------------------------------------------------------------
# Wrapper.
# ---------------------------------------------------------------------------
def my_conv1d(x, weight, bias, *, stride=1, padding=0, p=None, af=None,
              dim=None, use_bf16=False):
    """JAX/Pallas equivalent of MyConv1d.forward.

    x      : (B, L, C_in) float32
    weight : (C_out, C_in, K)   (PyTorch Conv1d layout)
    bias   : (C_out,)
    returns: (B, L_out, C_out)
    """
    if x.ndim != 3:
        raise ValueError("input_dim (%d) should equal to 3" % x.ndim)
    # TODO(synk): training-mode dropout (F.dropout with p) not implemented;
    # eval-mode dropout is the identity, which is what this kernel reproduces.

    B, L, C_in = x.shape
    C_out, C_in_w, K = weight.shape
    assert C_in == C_in_w

    if af is not None and af not in ("relu", "tanh", "sigmoid", "softmax"):
        raise NotImplementedError("unsupported activation %r" % (af,))
    if af == "softmax":
        if dim is None:
            raise ValueError("softmax requires an explicit dim")
        dim_n = dim % 3
    else:
        dim_n = None
    channel_softmax = (af == "softmax") and (dim_n == 2)

    L_pad = L + 2 * padding
    L_out = (L_pad - K) // stride + 1
    C_out_p = _round_up(C_out, 128)             # lane-dense output / weight columns
    in_dtype = jnp.bfloat16 if use_bf16 else x.dtype
    isz = jnp.dtype(in_dtype).itemsize
    out_dtype = x.dtype
    KC = K * C_in

    # Conv weight as (K, C_in, C_out_p): slab (k, c, :) multiplies x_pad[:, t*s+k, c].
    w3 = jnp.transpose(weight, (2, 1, 0))       # (K, C_in, C_out)
    if C_out_p != C_out:
        w3 = jnp.pad(w3, ((0, 0), (0, 0), (0, C_out_p - C_out)))
        bias_p = jnp.pad(bias, (0, C_out_p - C_out))
    else:
        bias_p = bias
    w3 = w3.astype(in_dtype)
    b2d = bias_p.reshape(1, C_out_p).astype(jnp.float32)

    vmem_limit, budget = _vmem_budget()
    n_transc = 0 if af in (None, "relu") else B * L_out * C_out
    x_pad = jnp.pad(x, ((0, 0), (padding, padding), (0, 0)))   # (B, L_pad, C_in)

    y_p = None

    if stride == 1 and K > 1:
        # ------ fast path: per-(batch, L-tile) grid with a (K-1)-row halo side
        # array; x is read from HBM exactly once (no im2col inflation). -------
        per_row = 2 * C_in * isz + 3 * C_out_p * 4 + K * C_in * isz
        fixed = 2 * (KC * C_out_p * isz + C_out_p * 4) + 2 * K * C_in * isz
        tile = _pick_row_tile(per_row, fixed, budget)
        nL = max(1, _cdiv(L_out, tile))
        if B * nL < 2 and L_out >= 16:
            nL = 2                      # >=2 grid steps so both v7x TCs get work
        TILE_L = _round_up(_cdiv(L_out, nL), 8)
        nL = _cdiv(L_out, TILE_L)
        L_out_p = nL * TILE_L

        if K - 1 <= TILE_L:             # halo fits inside one neighbouring tile
            L_src = L_out_p + K - 1
            if L_pad < L_src:
                x_ext = jnp.pad(x_pad, ((0, 0), (0, L_src - L_pad), (0, 0)))
            else:
                x_ext = x_pad[:, :L_src, :]
            x_main = x_ext[:, :L_out_p, :].astype(in_dtype)
            # Halo rows for tile j: x_ext[:, (j+1)*TILE_L : (j+1)*TILE_L+K-1, :]
            x_shift = x_ext[:, TILE_L:, :]
            tgt = nL * TILE_L
            cur = x_shift.shape[1]
            if cur < tgt:
                x_shift = jnp.pad(x_shift, ((0, 0), (0, tgt - cur), (0, 0)))
            halo = (x_shift[:, :tgt, :].reshape(B, nL, TILE_L, C_in)[:, :, :K - 1, :]
                    ).astype(in_dtype)

            kernel = functools.partial(
                _conv1d_stride1_kernel, K=K, af=af,
                channel_softmax=channel_softmax, c_out=C_out)
            cost = pl.CostEstimate(
                flops=2 * B * L_out_p * KC * C_out_p,
                transcendentals=n_transc,
                bytes_accessed=isz * (x_main.size + halo.size + w3.size)
                + 4 * (b2d.size + B * L_out_p * C_out_p))

            def build(single_buffer):
                return pl.pallas_call(
                    kernel,
                    out_shape=jax.ShapeDtypeStruct((B, L_out_p, C_out_p), out_dtype),
                    grid=(B, nL),
                    in_specs=[
                        pl.BlockSpec((1, TILE_L, C_in), lambda b, j: (b, j, 0)),
                        pl.BlockSpec((1, 1, K - 1, C_in), lambda b, j: (b, j, 0, 0)),
                        _const_spec((K, C_in, C_out_p), lambda b, j: (0, 0, 0),
                                    single_buffer),
                        _const_spec((1, C_out_p), lambda b, j: (0, 0), single_buffer),
                    ],
                    out_specs=pl.BlockSpec((1, TILE_L, C_out_p),
                                           lambda b, j: (b, j, 0)),
                    compiler_params=pltpu.CompilerParams(
                        dimension_semantics=("parallel", "parallel"),
                        vmem_limit_bytes=vmem_limit),
                    cost_estimate=cost,
                )

            out = _call_with_const_fallback(build, (x_main, halo, w3, b2d))
            y_p = out[:, :L_out, :]

    if y_p is None:
        # ------ general path (stride > 1, K == 1, or oversized halo): fold the
        # K taps into the contraction via a one-shot im2col, one matmul per tile.
        # TODO(synk): for very large K*C_in / C_out, add output-channel and
        # reduction grid axes so weight tiles stay bounded on v7x's 64 MiB VMEM.
        taps = [
            jax.lax.slice(
                x_pad, (0, k, 0),
                (B, k + stride * (L_out - 1) + 1, C_in), (1, stride, 1))
            for k in range(K)
        ]
        x_unf = jnp.concatenate(taps, axis=-1)          # (B, L_out, K*C_in)
        BL = B * L_out

        per_row = 2 * KC * isz + 3 * C_out_p * 4
        fixed = 2 * (KC * C_out_p * isz + C_out_p * 4)
        tile = _pick_row_tile(per_row, fixed, budget)
        cap = _round_up(_cdiv(BL, 2), 8) if BL >= 16 else _round_up(BL, 8)
        TILE_BL = min(tile, cap, _round_up(BL, 8))
        BL_p = _round_up(BL, TILE_BL)

        x_flat = x_unf.reshape(BL, KC).astype(in_dtype)
        if BL_p != BL:
            x_flat = jnp.pad(x_flat, ((0, BL_p - BL), (0, 0)))
        w_mat = w3.reshape(KC, C_out_p)

        kernel = functools.partial(
            _conv1d_matmul_kernel, af=af,
            channel_softmax=channel_softmax, c_out=C_out)
        cost = pl.CostEstimate(
            flops=2 * BL_p * KC * C_out_p,
            transcendentals=n_transc,
            bytes_accessed=isz * (BL_p * KC + KC * C_out_p)
            + 4 * (C_out_p + BL_p * C_out_p))

        def build(single_buffer):
            return pl.pallas_call(
                kernel,
                out_shape=jax.ShapeDtypeStruct((BL_p, C_out_p), out_dtype),
                grid=(BL_p // TILE_BL,),
                in_specs=[
                    pl.BlockSpec((TILE_BL, KC), lambda i: (i, 0)),
                    _const_spec((KC, C_out_p), lambda i: (0, 0), single_buffer),
                    _const_spec((1, C_out_p), lambda i: (0, 0), single_buffer),
                ],
                out_specs=pl.BlockSpec((TILE_BL, C_out_p), lambda i: (i, 0)),
                compiler_params=pltpu.CompilerParams(
                    dimension_semantics=("parallel",),
                    vmem_limit_bytes=vmem_limit),
                cost_estimate=cost,
            )

        out = _call_with_const_fallback(build, (x_flat, w_mat, b2d))
        y_p = out[:BL, :].reshape(B, L_out, C_out_p)

    y = y_p[..., :C_out]
    if af == "softmax" and not channel_softmax:
        # Non-channel softmax dims are applied in plain JAX after the conv.
        y = jax.nn.softmax(y, axis=dim_n)
    return y


# ---------------------------------------------------------------------------
# Pure-JAX reference (nn.Conv1d on NCW + activation) for validation.
# ---------------------------------------------------------------------------
def _reference(x, weight, bias, *, stride, padding, af, dim):
    x_ncw = jnp.transpose(x, (0, 2, 1))
    y = jax.lax.conv_general_dilated(
        x_ncw, weight,
        window_strides=(stride,),
        padding=[(padding, padding)],
        dimension_numbers=("NCH", "OIH", "NCH"),
    ) + bias[None, :, None]
    y = jnp.transpose(y, (0, 2, 1))
    if af == "relu":
        y = jnp.maximum(y, 0.0)
    elif af == "tanh":
        y = jnp.tanh(y)
    elif af == "sigmoid":
        y = jax.nn.sigmoid(y)
    elif af == "softmax":
        y = jax.nn.softmax(y, axis=(dim % 3))
    return y


if __name__ == "__main__":
    key = jax.random.PRNGKey(0)
    kx, kw, kb = jax.random.split(key, 3)

    # Module config (mirrors MyConv1d(4, 8, 3, stride, padding=1, af=...)).
    B, L, C_in, C_out, K = 2, 16, 4, 8, 3
    x = jax.random.normal(kx, (B, L, C_in), dtype=jnp.float32)

    # Deterministic Conv1d param init (PyTorch default U(-sqrt(k), sqrt(k)),
    # k = 1/(C_in*K)), using the JAX PRNG instead of a checkpoint.
    bound = 1.0 / math.sqrt(C_in * K)
    weight = jax.random.uniform(kw, (C_out, C_in, K), jnp.float32, -bound, bound)
    bias = jax.random.uniform(kb, (C_out,), jnp.float32, -bound, bound)

    # Check 1: stride=1, padding=1, relu -> halo fast path (no im2col).
    y1 = my_conv1d(x, weight, bias, stride=1, padding=1, p=None, af="relu", dim=None)
    y1 = jax.block_until_ready(y1)
    r1 = _reference(x, weight, bias, stride=1, padding=1, af="relu", dim=None)
    assert y1.shape == (B, 16, C_out)
    assert jnp.allclose(y1, r1, atol=1e-5, rtol=1e-5), "relu (stride-1) path mismatch"

    # Check 2: strided conv + fused channel softmax -> general (im2col) path.
    # (looser tolerance: the fused softmax uses the approximate EUP reciprocal)
    y2 = my_conv1d(x, weight, bias, stride=2, padding=1, p=None, af="softmax", dim=2)
    y2 = jax.block_until_ready(y2)
    r2 = _reference(x, weight, bias, stride=2, padding=1, af="softmax", dim=2)
    assert y2.shape == (B, 8, C_out)
    assert jnp.allclose(y2, r2, atol=2e-3, rtol=2e-3), "softmax path mismatch"

    # Check 3: bf16 MXU operands (f32 accumulation) on the stride-1 path.
    y3 = my_conv1d(x, weight, bias, stride=1, padding=1, p=None, af="tanh",
                   dim=None, use_bf16=True)
    y3 = jax.block_until_ready(y3)
    r3 = _reference(x, weight, bias, stride=1, padding=1, af="tanh", dim=None)
    assert y3.shape == (B, 16, C_out)
    assert jnp.allclose(y3, r3, atol=2e-2, rtol=2e-2), "bf16 path mismatch"

    print("KERNEL_OK")
</pallas_src>

<mosaic_0001>
module attributes {stable_mosaic.version = 11 : i64} {
  func.func @_conv1d_stride1_kernel(%arg0: i32, %arg1: i32, %arg2: memref<1x16x4xf32, #tpu.memory_space<vmem>>, %arg3: memref<1x1x2x4xf32, #tpu.memory_space<vmem>>, %arg4: memref<3x4x128xf32, #tpu.memory_space<vmem>>, %arg5: memref<1x128xf32, #tpu.memory_space<vmem>>, %arg6: memref<1x16x128xf32, #tpu.memory_space<vmem>>) attributes {dimension_semantics = [#tpu.dimension_semantics<parallel>, #tpu.dimension_semantics<parallel>], iteration_bounds = array<i64: 2, 1>, scalar_prefetch = 0 : i64, scratch_operands = 0 : i64, tpu.core_type = #tpu.core_type<tc>, window_params = [{transform_indices = @transform_0, window_bounds = array<i64: 1, 16, 4>}, {transform_indices = @transform_1, window_bounds = array<i64: 1, 1, 2, 4>}, {pipeline_mode = #tpu.pipeline_mode<synchronous>, transform_indices = @transform_2, window_bounds = array<i64: 3, 4, 128>}, {pipeline_mode = #tpu.pipeline_mode<synchronous>, transform_indices = @transform_3, window_bounds = array<i64: 1, 128>}, {transform_indices = @transform_4, window_bounds = array<i64: 1, 16, 128>}]} {
    %c0 = arith.constant 0 : index
    %c0_0 = arith.constant 0 : index
    %c0_1 = arith.constant 0 : index
    %0 = vector.load %arg2[%c0, %c0_0, %c0_1] : memref<1x16x4xf32, #tpu.memory_space<vmem>>, vector<1x16x4xf32>
    %1 = vector.shape_cast %0 : vector<1x16x4xf32> to vector<16x4xf32>
    %c0_2 = arith.constant 0 : index
    %c0_3 = arith.constant 0 : index
    %c0_4 = arith.constant 0 : index
    %c0_5 = arith.constant 0 : index
    %2 = vector.load %arg3[%c0_2, %c0_3, %c0_4, %c0_5] : memref<1x1x2x4xf32, #tpu.memory_space<vmem>>, vector<1x1x2x4xf32>
    %3 = vector.shape_cast %2 : vector<1x1x2x4xf32> to vector<2x4xf32>
    %4 = tpu.concatenate %1, %3 in 0 : vector<16x4xf32>, vector<2x4xf32> -> vector<18x4xf32>
    %cst = arith.constant 0.000000e+00 : f32
    %5 = vector.broadcast %cst : f32 to vector<16x128xf32>
    %6 = vector.extract_strided_slice %4 {offsets = [0, 0], sizes = [16, 4], strides = [1, 1]} : vector<18x4xf32> to vector<16x4xf32>
    %c0_6 = arith.constant 0 : index
    %c0_7 = arith.constant 0 : index
    %c0_8 = arith.constant 0 : index
    %7 = vector.load %arg4[%c0_6, %c0_7, %c0_8] : memref<3x4x128xf32, #tpu.memory_space<vmem>>, vector<1x4x128xf32>
    %8 = vector.shape_cast %7 : vector<1x4x128xf32> to vector<4x128xf32>
    %cst_9 = arith.constant dense<0.000000e+00> : vector<16x128xf32>
    %9 = tpu.matmul %6, %8, %cst_9 {dimension_numbers = #tpu.dot_dimension_numbers<[1], [0], [0], [1], [0, 0, 1, 1], [], []>} : vector<16x4xf32>, vector<4x128xf32>, vector<16x128xf32> -> vector<16x128xf32>
    %10 = arith.addf %5, %9 : vector<16x128xf32>
    %11 = vector.extract_strided_slice %4 {offsets = [1, 0], sizes = [16, 4], strides = [1, 1]} : vector<18x4xf32> to vector<16x4xf32>
    %c1 = arith.constant 1 : index
    %c0_10 = arith.constant 0 : index
    %c0_11 = arith.constant 0 : index
    %12 = vector.load %arg4[%c1, %c0_10, %c0_11] : memref<3x4x128xf32, #tpu.memory_space<vmem>>, vector<1x4x128xf32>
    %13 = vector.shape_cast %12 : vector<1x4x128xf32> to vector<4x128xf32>
    %cst_12 = arith.constant dense<0.000000e+00> : vector<16x128xf32>
    %14 = tpu.matmul %11, %13, %cst_12 {dimension_numbers = #tpu.dot_dimension_numbers<[1], [0], [0], [1], [0, 0, 1, 1], [], []>} : vector<16x4xf32>, vector<4x128xf32>, vector<16x128xf32> -> vector<16x128xf32>
    %15 = arith.addf %10, %14 : vector<16x128xf32>
    %16 = vector.extract_strided_slice %4 {offsets = [2, 0], sizes = [16, 4], strides = [1, 1]} : vector<18x4xf32> to vector<16x4xf32>
    %c2 = arith.constant 2 : index
    %c0_13 = arith.constant 0 : index
    %c0_14 = arith.constant 0 : index
    %17 = vector.load %arg4[%c2, %c0_13, %c0_14] : memref<3x4x128xf32, #tpu.memory_space<vmem>>, vector<1x4x128xf32>
    %18 = vector.shape_cast %17 : vector<1x4x128xf32> to vector<4x128xf32>
    %cst_15 = arith.constant dense<0.000000e+00> : vector<16x128xf32>
    %19 = tpu.matmul %16, %18, %cst_15 {dimension_numbers = #tpu.dot_dimension_numbers<[1], [0], [0], [1], [0, 0, 1, 1], [], []>} : vector<16x4xf32>, vector<4x128xf32>, vector<16x128xf32> -> vector<16x128xf32>
    %20 = arith.addf %15, %19 : vector<16x128xf32>
    %c0_16 = arith.constant 0 : index
    %c0_17 = arith.constant 0 : index
    %21 = vector.load %arg5[%c0_16, %c0_17] : memref<1x128xf32, #tpu.memory_space<vmem>>, vector<1x128xf32>
    %22 = vector.broadcast %21 : vector<1x128xf32> to vector<16x128xf32>
    %23 = arith.addf %20, %22 : vector<16x128xf32>
    %cst_18 = arith.constant 0.000000e+00 : f32
    %24 = vector.broadcast %cst_18 : f32 to vector<16x128xf32>
    %25 = arith.maximumf %23, %24 : vector<16x128xf32>
    %c0_19 = arith.constant 0 : index
    %c0_20 = arith.constant 0 : index
    %c0_21 = arith.constant 0 : index
    %26 = vector.load %arg6[%c0_19, %c0_20, %c0_21] : memref<1x16x128xf32, #tpu.memory_space<vmem>>, vector<1x16x128xf32>
    %27 = vector.shape_cast %26 : vector<1x16x128xf32> to vector<16x128xf32>
    %28 = vector.shape_cast %25 : vector<16x128xf32> to vector<1x16x128xf32>
    tpu.vector_store %arg6[%c0_19, %c0_20, %c0_21], %28 {strides = array<i32>} : memref<1x16x128xf32, #tpu.memory_space<vmem>>, vector<1x16x128xf32>,
    return
  }
  func.func @transform_0(%arg0: i32, %arg1: i32) -> (i32, i32, i32) {
    %c0_i32 = arith.constant 0 : i32
    %c0_i32_0 = arith.constant 0 : i32
    return %arg0, %arg1, %c0_i32 : i32, i32, i32
  }
  func.func @transform_1(%arg0: i32, %arg1: i32) -> (i32, i32, i32, i32) {
    %c0_i32 = arith.constant 0 : i32
    %c0_i32_0 = arith.constant 0 : i32
    %c0_i32_1 = arith.constant 0 : i32
    return %arg0, %arg1, %c0_i32, %c0_i32_0 : i32, i32, i32, i32
  }
  func.func @transform_2(%arg0: i32, %arg1: i32) -> (i32, i32, i32) {
    %c0_i32 = arith.constant 0 : i32
    %c0_i32_0 = arith.constant 0 : i32
    %c0_i32_1 = arith.constant 0 : i32
    %c0_i32_2 = arith.constant 0 : i32
    return %c0_i32, %c0_i32_0, %c0_i32_1 : i32, i32, i32
  }
  func.func @transform_3(%arg0: i32, %arg1: i32) -> (i32, i32) {
    %c0_i32 = arith.constant 0 : i32
    %c0_i32_0 = arith.constant 0 : i32
    %c0_i32_1 = arith.constant 0 : i32
    return %c0_i32, %c0_i32_0 : i32, i32
  }
  func.func @transform_4(%arg0: i32, %arg1: i32) -> (i32, i32, i32) {
    %c0_i32 = arith.constant 0 : i32
    %c0_i32_0 = arith.constant 0 : i32
    return %arg0, %arg1, %c0_i32 : i32, i32, i32
  }
}

module attributes {stable_mosaic.version = 11 : i64} {
  func.func @_conv1d_stride1_kernel(%arg0: i32, %arg1: i32, %arg2: memref<1x16x4xf32, #tpu.memory_space<vmem>>, %arg3: memref<1x1x2x4xf32, #tpu.memory_space<vmem>>, %arg4: memref<3x4x128xf32, #tpu.memory_space<vmem>>, %arg5: memref<1x128xf32, #tpu.memory_space<vmem>>, %arg6: memref<1x16x128xf32, #tpu.memory_space<vmem>>) attributes {dimension_semantics = [#tpu.dimension_semantics<parallel>, #tpu.dimension_semantics<parallel>], iteration_bounds = array<i64: 2, 1>, scalar_prefetch = 0 : i64, scratch_operands = 0 : i64, tpu.core_type = #tpu.core_type<tc>, window_params = [{transform_indices = @transform_0, window_bounds = array<i64: 1, 16, 4>}, {transform_indices = @transform_1, window_bounds = array<i64: 1, 1, 2, 4>}, {pipeline_mode = #tpu.pipeline_mode<synchronous>, transform_indices = @transform_2, window_bounds = array<i64: 3, 4, 128>}, {pipeline_mode = #tpu.pipeline_mode<synchronous>, transform_indices = @transform_3, window_bounds = array<i64: 1, 128>}, {transform_indices = @transform_4, window_bounds = array<i64: 1, 16, 128>}]} {
    %c0 = arith.constant 0 : index
    %c0_0 = arith.constant 0 : index
    %c0_1 = arith.constant 0 : index
    %0 = vector.load %arg2[%c0, %c0_0, %c0_1] : memref<1x16x4xf32, #tpu.memory_space<vmem>>, vector<1x16x4xf32>
    %1 = vector.shape_cast %0 : vector<1x16x4xf32> to vector<16x4xf32>
    %c0_2 = arith.constant 0 : index
    %c0_3 = arith.constant 0 : index
    %c0_4 = arith.constant 0 : index
    %c0_5 = arith.constant 0 : index
    %2 = vector.load %arg3[%c0_2, %c0_3, %c0_4, %c0_5] : memref<1x1x2x4xf32, #tpu.memory_space<vmem>>, vector<1x1x2x4xf32>
    %3 = vector.shape_cast %2 : vector<1x1x2x4xf32> to vector<2x4xf32>
    %4 = tpu.concatenate %1, %3 in 0 : vector<16x4xf32>, vector<2x4xf32> -> vector<18x4xf32>
    %cst = arith.constant 0.000000e+00 : f32
    %5 = vector.broadcast %cst : f32 to vector<16x128xf32>
    %6 = vector.extract_strided_slice %4 {offsets = [0, 0], sizes = [16, 4], strides = [1, 1]} : vector<18x4xf32> to vector<16x4xf32>
    %c0_6 = arith.constant 0 : index
    %c0_7 = arith.constant 0 : index
    %c0_8 = arith.constant 0 : index
    %7 = vector.load %arg4[%c0_6, %c0_7, %c0_8] : memref<3x4x128xf32, #tpu.memory_space<vmem>>, vector<1x4x128xf32>
    %8 = vector.shape_cast %7 : vector<1x4x128xf32> to vector<4x128xf32>
    %cst_9 = arith.constant dense<0.000000e+00> : vector<16x128xf32>
    %9 = tpu.matmul %6, %8, %cst_9 {dimension_numbers = #tpu.dot_dimension_numbers<[1], [0], [0], [1], [0, 0, 1, 1], [], []>} : vector<16x4xf32>, vector<4x128xf32>, vector<16x128xf32> -> vector<16x128xf32>
    %10 = arith.addf %5, %9 : vector<16x128xf32>
    %11 = vector.extract_strided_slice %4 {offsets = [1, 0], sizes = [16, 4], strides = [1, 1]} : vector<18x4xf32> to vector<16x4xf32>
    %c1 = arith.constant 1 : index
    %c0_10 = arith.constant 0 : index
    %c0_11 = arith.constant 0 : index
    %12 = vector.load %arg4[%c1, %c0_10, %c0_11] : memref<3x4x128xf32, #tpu.memory_space<vmem>>, vector<1x4x128xf32>
    %13 = vector.shape_cast %12 : vector<1x4x128xf32> to vector<4x128xf32>
    %cst_12 = arith.constant dense<0.000000e+00> : vector<16x128xf32>
    %14 = tpu.matmul %11, %13, %cst_12 {dimension_numbers = #tpu.dot_dimension_numbers<[1], [0], [0], [1], [0, 0, 1, 1], [], []>} : vector<16x4xf32>, vector<4x128xf32>, vector<16x128xf32> -> vector<16x128xf32>
    %15 = arith.addf %10, %14 : vector<16x128xf32>
    %16 = vector.extract_strided_slice %4 {offsets = [2, 0], sizes = [16, 4], strides = [1, 1]} : vector<18x4xf32> to vector<16x4xf32>
    %c2 = arith.constant 2 : index
    %c0_13 = arith.constant 0 : index
    %c0_14 = arith.constant 0 : index
    %17 = vector.load %arg4[%c2, %c0_13, %c0_14] : memref<3x4x128xf32, #tpu.memory_space<vmem>>, vector<1x4x128xf32>
    %18 = vector.shape_cast %17 : vector<1x4x128xf32> to vector<4x128xf32>
    %cst_15 = arith.constant dense<0.000000e+00> : vector<16x128xf32>
    %19 = tpu.matmul %16, %18, %cst_15 {dimension_numbers = #tpu.dot_dimension_numbers<[1], [0], [0], [1], [0, 0, 1, 1], [], []>} : vector<16x4xf32>, vector<4x128xf32>, vector<16x128xf32> -> vector<16x128xf32>
    %20 = arith.addf %15, %19 : vector<16x128xf32>
    %c0_16 = arith.constant 0 : index
    %c0_17 = arith.constant 0 : index
    %21 = vector.load %arg5[%c0_16, %c0_17] : memref<1x128xf32, #tpu.memory_space<vmem>>, vector<1x128xf32>
    %22 = vector.broadcast %21 : vector<1x128xf32> to vector<16x128xf32>
    %23 = arith.addf %20, %22 : vector<16x128xf32>
    %cst_18 = arith.constant 0.000000e+00 : f32
    %24 = vector.broadcast %cst_18 : f32 to vector<16x128xf32>
    %25 = arith.maximumf %23, %24 : vector<16x128xf32>
    %c0_19 = arith.constant 0 : index
    %c0_20 = arith.constant 0 : index
    %c0_21 = arith.constant 0 : index
    %26 = vector.load %arg6[%c0_19, %c0_20, %c0_21] : memref<1x16x128xf32, #tpu.memory_space<vmem>>, vector<1x16x128xf32>
    %27 = vector.shape_cast %26 : vector<1x16x128xf32> to vector<16x128xf32>
    %28 = vector.shape_cast %25 : vector<16x128xf32> to vector<1x16x128xf32>
    tpu.vector_store %arg6[%c0_19, %c0_20, %c0_21], %28 {strides = array<i32>} : memref<1x16x128xf32, #tpu.memory_space<vmem>>, vector<1x16x128xf32>,
    return
  }
  func.func @transform_0(%arg0: i32, %arg1: i32) -> (i32, i32, i32) {
    %c0_i32 = arith.constant 0 : i32
    %c0_i32_0 = arith.constant 0 : i32
    return %arg0, %arg1, %c0_i32 : i32, i32, i32
  }
  func.func @transform_1(%arg0: i32, %arg1: i32) -> (i32, i32, i32, i32) {
    %c0_i32 = arith.constant 0 : i32
    %c0_i32_0 = arith.constant 0 : i32
    %c0_i32_1 = arith.constant 0 : i32
    return %arg0, %arg1, %c0_i32, %c0_i32_0 : i32, i32, i32, i32
  }
  func.func @transform_2(%arg0: i32, %arg1: i32) -> (i32, i32, i32) {
    %c0_i32 = arith.constant 0 : i32
    %c0_i32_0 = arith.constant 0 : i32
    %c0_i32_1 = arith.constant 0 : i32
    %c0_i32_2 = arith.constant 0 : i32
    return %c0_i32, %c0_i32_0, %c0_i32_1 : i32, i32, i32
  }
  func.func @transform_3(%arg0: i32, %arg1: i32) -> (i32, i32) {
    %c0_i32 = arith.constant 0 : i32
    %c0_i32_0 = arith.constant 0 : i32
    %c0_i32_1 = arith.constant 0 : i32
    return %c0_i32, %c0_i32_0 : i32, i32
  }
  func.func @transform_4(%arg0: i32, %arg1: i32) -> (i32, i32, i32) {
    %c0_i32 = arith.constant 0 : i32
    %c0_i32_0 = arith.constant 0 : i32
    return %arg0, %arg1, %c0_i32 : i32, i32, i32
  }
}

</mosaic_0001>

<llo_original>
// kernel: tpu_custom_call.1
$region0: #{tpu_custom_call.1}
  #allocation0 [shape = 'u32[]', space=smem, size = 0x4, offset = 0x4, fixed_abs, tag = 'smem constant byte address 0x4 - core index']
  #allocation1 [shape = 'u32[144,128]{1,0:T(1,128)}', space=vmem, size = 0x12000, scoped, tag = 'internal scratch']
  %s0 = inlined_call_operand.vmem [shape: f32[2,16,4], index: 0, kind: input, shape index: {}]
  %s1 = inlined_call_operand.vmem [shape: f32[2,1,2,4], index: 1, kind: input, shape index: {}]
  %s2 = inlined_call_operand.vmem [shape: f32[3,4,128], index: 2, kind: input, shape index: {}]
  %s3 = inlined_call_operand.vmem [shape: f32[1,128], index: 3, kind: input, shape index: {}]
  %s4 = inlined_call_operand.hbm [shape: f32[2,16,128], index: 4, kind: output, shape index: {}]
  %s5 = sld [smem:[#allocation0]]
  $region49: #{tpu_custom_call.1} parent=0
    _
  %s7 = ssub.s32 1, %s5
  %s8 = scalar_select 0, %s7, %s5
  $region1: #{tpu_custom_call.1} parent=0
    #allocation2 [shape = 'u8[16384]{0}', space=vmem, size = 0x4000, scoped, tag = 'output window, operand 0']
    #allocation3 [shape = 's32[2]{0}', space=sflag, size = 0x8, scoped, tag = 'scoped memory for tpu_custom_call.1']
    %9 = vsyncpa [#allocation3], 0
    %s10 = scalar_lea.sflag [#allocation3], 1
    %11 = vsyncpa %s10, 0
    loop: start=0, step=1, limit=4
    $region2: #{tpu_custom_call.1} parent=1 // loop_pre_header
      _
    $region3: #{tpu_custom_call.1} parent=1 // loop_header
      %s13 = sphi 0, %s17
      %p14 = scmp.ge.s32.totalorder %s13, 4
      %s20 = sphi 0, %s32
      %s21 = sphi 0, %s28
      %s22 = sphi 0, %s20
      %s23 = sphi 0, %s21
      %s24 = sphi 0, %s22
      %s25 = sphi 0, %s23
      %s37 = sphi 0, %s39
      %s40 = sphi 0, %s37
      %s41 = sphi 0, %s40
      %s57 = sphi 0, %s41
      %s65 = sphi 0, %s67
      %s68 = sphi 0, %s65
      %s69 = sphi 0, %s68
      %s85 = sphi 0, %s69
      %s89 = sphi 0, %s89
      %s91 = sphi 0, %s89
      %s92 = sphi 0, %s91
      %s106 = sphi 0, %s92
      %s110 = sphi 0, %s110
      %s112 = sphi 0, %s110
      %s113 = sphi 0, %s112
      %s127 = sphi 0, %s113
      %s135 = sphi 0, %s137
      %s138 = sphi 0, %s135
      %s139 = sphi 0, %s138
      %s155 = sphi 0, %s139
    $region4: #{tpu_custom_call.1} parent=1 // loop_header_branch
      %16 = sbr.rel (%p14) target = $region8
    $region5: #{tpu_custom_call.1} parent=1 // loop_body
      %s18 = ssub.s32 %s13, 1
      %s19 = ssub.s32 %s13, 2
      %s26 = sadd.s32 1, %s21
      %p27 = scmp.ge.s32.totalorder %s26, 1
      %s28 = scalar_select %p27, 0, %s26
      %s29 = sadd.s32 1, %s20
      %s30 = scalar_select %p27, %s29, %s20
      %p31 = scmp.ge.s32.totalorder %s30, 2
      %s32 = scalar_select %p31, 0, %s30
      %s33 = ssub.s32 %s20, %s32
      %s34 = ssub.s32 %s21, %s28
      %s35 = sor.u32 %s33, %s34
      %p36 = scmp.eq.s32.totalorder %s35, 0
      %s38 = sadd.s32 %s37, 1
      %s39 = scalar_select %p36, %s37, %s38
      %p42 = pneg %p36
      %p43 = scmp.eq.s32.totalorder %s13, 1
      %p44 = por %p42, %p43
      %p45 = scmp.ne.s32.totalorder %s37, %s40
      %p46 = scmp.eq.s32.totalorder %s13, 0
      %p47 = por %p45, %p46
      %p48 = scmp.ne.s32.totalorder %s37, %s40
      %p49 = scmp.eq.s32.totalorder %s18, 1
      %p50 = por %p48, %p49
      %p51 = scmp.ne.s32.totalorder %s40, %s41
      %p52 = scmp.eq.s32.totalorder %s18, 0
      %p53 = por %p51, %p52
      %p54 = scmp.ne.s32.totalorder %s40, %s41
      %p55 = scmp.eq.s32.totalorder %s19, 1
      %p56 = por %p54, %p55
      %p58 = scmp.ne.s32.totalorder %s41, %s57
      %p59 = scmp.eq.s32.totalorder %s19, 0
      %p60 = por %p58, %p59
      %s61 = ssub.s32 %s20, %s32
      %s62 = ssub.s32 %s21, %s28
      %s63 = sor.u32 %s61, %s62
      %p64 = scmp.eq.s32.totalorder %s63, 0
      %s66 = sadd.s32 %s65, 1
      %s67 = scalar_select %p64, %s65, %s66
      %p70 = pneg %p64
      %p71 = scmp.eq.s32.totalorder %s13, 1
      %p72 = por %p70, %p71
      %p73 = scmp.ne.s32.totalorder %s65, %s68
      %p74 = scmp.eq.s32.totalorder %s13, 0
      %p75 = por %p73, %p74
      %p76 = scmp.ne.s32.totalorder %s65, %s68
      %p77 = scmp.eq.s32.totalorder %s18, 1
      %p78 = por %p76, %p77
      %p79 = scmp.ne.s32.totalorder %s68, %s69
      %p80 = scmp.eq.s32.totalorder %s18, 0
      %p81 = por %p79, %p80
      %p82 = scmp.ne.s32.totalorder %s68, %s69
      %p83 = scmp.eq.s32.totalorder %s19, 1
      %p84 = por %p82, %p83
      %p86 = scmp.ne.s32.totalorder %s69, %s85
      %p87 = scmp.eq.s32.totalorder %s19, 0
      %p88 = por %p86, %p87
      %s90 = sadd.s32 %s89, 1
      %p93 = scmp.eq.s32.totalorder %s13, 1
      %p94 = scmp.ne.s32.totalorder %s89, %s91
      %p95 = scmp.eq.s32.totalorder %s13, 0
      %p96 = por %p94, %p95
      %p97 = scmp.ne.s32.totalorder %s89, %s91
      %p98 = scmp.eq.s32.totalorder %s18, 1
      %p99 = por %p97, %p98
      %p100 = scmp.ne.s32.totalorder %s91, %s92
      %p101 = scmp.eq.s32.totalorder %s18, 0
      %p102 = por %p100, %p101
      %p103 = scmp.ne.s32.totalorder %s91, %s92
      %p104 = scmp.eq.s32.totalorder %s19, 1
      %p105 = por %p103, %p104
      %p107 = scmp.ne.s32.totalorder %s92, %s106
      %p108 = scmp.eq.s32.totalorder %s19, 0
      %p109 = por %p107, %p108
      %s111 = sadd.s32 %s110, 1
      %p114 = scmp.eq.s32.totalorder %s13, 1
      %p115 = scmp.ne.s32.totalorder %s110, %s112
      %p116 = scmp.eq.s32.totalorder %s13, 0
      %p117 = por %p115, %p116
      %p118 = scmp.ne.s32.totalorder %s110, %s112
      %p119 = scmp.eq.s32.totalorder %s18, 1
      %p120 = por %p118, %p119
      %p121 = scmp.ne.s32.totalorder %s112, %s113
      %p122 = scmp.eq.s32.totalorder %s18, 0
      %p123 = por %p121, %p122
      %p124 = scmp.ne.s32.totalorder %s112, %s113
      %p125 = scmp.eq.s32.totalorder %s19, 1
      %p126 = por %p124, %p125
      %p128 = scmp.ne.s32.totalorder %s113, %s127
      %p129 = scmp.eq.s32.totalorder %s19, 0
      %p130 = por %p128, %p129
      %s131 = ssub.s32 %s20, %s32
      %s132 = ssub.s32 %s21, %s28
      %s133 = sor.u32 %s131, %s132
      %p134 = scmp.eq.s32.totalorder %s133, 0
      %s136 = sadd.s32 %s135, 1
      %s137 = scalar_select %p134, %s135, %s136
      %p140 = pneg %p134
      %p141 = scmp.eq.s32.totalorder %s13, 1
      %p142 = por %p140, %p141
      %p143 = scmp.ne.s32.totalorder %s135, %s138
      %p144 = scmp.eq.s32.totalorder %s13, 0
      %p145 = por %p143, %p144
      %p146 = scmp.ne.s32.totalorder %s135, %s138
      %p147 = scmp.eq.s32.totalorder %s18, 1
      %p148 = por %p146, %p147
      %p149 = scmp.ne.s32.totalorder %s138, %s139
      %p150 = scmp.eq.s32.totalorder %s18, 0
      %p151 = por %p149, %p150
      %p152 = scmp.ne.s32.totalorder %s138, %s139
      %p153 = scmp.eq.s32.totalorder %s19, 1
      %p154 = por %p152, %p153
      %p156 = scmp.ne.s32.totalorder %s139, %s155
      %p157 = scmp.eq.s32.totalorder %s19, 0
      %p158 = por %p156, %p157
      %p159 = scmp.le.s32.totalorder 1, %s13
      %p160 = scmp.lt.s32.totalorder %s13, 3
      %p161 = pnand %p159, %p160
      %p162 = pneg %p161
      // Predicated region
      $region9: #{tpu_custom_call.1} parent=5 // pred_check
        _
      $region10: #{tpu_custom_call.1} parent=5 // pred_check_branch
        %164 = sbr.rel (%p161) target = $region12
      $region11: #{tpu_custom_call.1} parent=5 // pred_region
        %s165 = ssub.s32 %s13, 1
        // Predicated region
        $region13: #{tpu_custom_call.1} parent=11 // pred_check
          %p166 = pneg %p102
        $region14: #{tpu_custom_call.1} parent=11 // pred_check_branch
          %168 = sbr.rel (%p166) target = $region16
        $region15: #{tpu_custom_call.1} parent=11 // pred_region
          _
        $region16: #{tpu_custom_call.1} parent=11 // pred_fallthru
          _
        // Predicated region
        $region17: #{tpu_custom_call.1} parent=11 // pred_check
          %p169 = pneg %p123
        $region18: #{tpu_custom_call.1} parent=11 // pred_check_branch
          %171 = sbr.rel (%p169) target = $region20
        $region19: #{tpu_custom_call.1} parent=11 // pred_region
          _
        $region20: #{tpu_custom_call.1} parent=11 // pred_fallthru
          _
      $region12: #{tpu_custom_call.1} parent=5 // pred_fallthru
        _
      %p172 = scmp.lt.s32.totalorder %s13, 2
      // Predicated region
      $region21: #{tpu_custom_call.1} parent=5 // pred_check
        %p173 = pneg %p172
      $region22: #{tpu_custom_call.1} parent=5 // pred_check_branch
        %175 = sbr.rel (%p173) target = $region24
      $region23: #{tpu_custom_call.1} parent=5 // pred_region
        // Predicated region
        $region25: #{tpu_custom_call.1} parent=23 // pred_check
          %p176 = pneg %p47
        $region26: #{tpu_custom_call.1} parent=23 // pred_check_branch
          %178 = sbr.rel (%p176) target = $region28
        $region27: #{tpu_custom_call.1} parent=23 // pred_region
          %s179 = smul.u32 2, %s21
          %p180 = scmp.lt.s32.totalorder %s20, 1
          %s181 = scalar_select %p180, %s20, 1
          %p182 = scmp.lt.s32.totalorder %s179, 1
          %s183 = scalar_select %p182, %s179, 1
          %s184 = smul.addr %s181, 2
          %s185 = sadd.s32 %s183, %s184
          %s186 = smul.addr %s185, 8
          %s187 = scalar_lea.vmem %s0, %s186
          %s188 = smul.u32 2, %s21
        $region28: #{tpu_custom_call.1} parent=23 // pred_fallthru
          _
        // Predicated region
        $region29: #{tpu_custom_call.1} parent=23 // pred_check
          %p189 = pneg %p75
        $region30: #{tpu_custom_call.1} parent=23 // pred_check_branch
          %191 = sbr.rel (%p189) target = $region32
        $region31: #{tpu_custom_call.1} parent=23 // pred_region
          %p192 = scmp.lt.s32.totalorder %s20, 1
          %s193 = scalar_select %p192, %s20, 1
          %p194 = scmp.lt.s32.totalorder %s21, 0
          %s195 = scalar_select %p194, %s21, 0
          %s196 = sadd.s32 %s195, %s193
          %s197 = smul.addr %s196, 2
          %s198 = scalar_lea.vmem %s1, %s197
        $region32: #{tpu_custom_call.1} parent=23 // pred_fallthru
          _
      $region24: #{tpu_custom_call.1} parent=5 // pred_fallthru
        _
      %p199 = scmp.le.s32.totalorder 1, %s13
      %p200 = scmp.lt.s32.totalorder %s13, 3
      %p201 = pnand %p199, %p200
      %p202 = pneg %p201
      // Predicated region
      $region33: #{tpu_custom_call.1} parent=5 // pred_check
        _
      $region34: #{tpu_custom_call.1} parent=5 // pred_check_branch
        %204 = sbr.rel (%p201) target = $region36
      $region35: #{tpu_custom_call.1} parent=5 // pred_region
        %s205 = ssub.s32 %s13, 1
        %s206 = smul.u32 2, %s23
        %p207 = scmp.lt.s32.totalorder %s22, 1
        %s208 = scalar_select %p207, %s22, 1
        %p209 = scmp.lt.s32.totalorder %s206, 1
        %s210 = scalar_select %p209, %s206, 1
        %s211 = smul.addr %s208, 2
        %s212 = sadd.s32 %s210, %s211
        %s213 = smul.addr %s212, 8
        %s214 = scalar_lea.vmem %s0, %s213
        %p215 = pneg %p53
        %p216 = pneg %p50
        %p217 = scmp.lt.s32.totalorder %s22, 1
        %s218 = scalar_select %p217, %s22, 1
        %p219 = scmp.lt.s32.totalorder %s23, 0
        %s220 = scalar_select %p219, %s23, 0
        %s221 = sadd.s32 %s220, %s218
        %s222 = smul.addr %s221, 2
        %s223 = scalar_lea.vmem %s1, %s222
        %p224 = pneg %p81
        %p225 = pneg %p78
        %p226 = pneg %p102
        %p227 = pneg %p99
        %p228 = pneg %p123
        %p229 = pneg %p120
        %p230 = pneg %p151
        %p231 = pneg %p148
        %s232 = sand.u32 %s138, 1
        %s233 = scalar_lea.sflag [#allocation3], %s232
        %s234 = sand.u32 %s138, 1
        %s235 = smul.addr %s234, 16
        %s236 = scalar_lea.vmem [#allocation2], %s235
        %s237 = smul.u32 2, %s23
        %p238 = scmp.lt.s32.totalorder %s22, 1
        %s239 = scalar_select %p238, %s22, 1
        %p240 = scmp.lt.s32.totalorder %s237, 1
        %s241 = scalar_select %p240, %s237, 1
        %s242 = smul.addr %s239, 2
        %s243 = sadd.s32 %s241, %s242
        %s244 = smul.addr %s243, 8
        %s245 = scalar_lea.vmem %s0, %s244
        %s246 = smul.u32 2, %s23
        %p247 = scmp.lt.s32.totalorder %s22, 1
        %s248 = scalar_select %p247, %s22, 1
        %p249 = scmp.lt.s32.totalorder %s23, 0
        %s250 = scalar_select %p249, %s23, 0
        %s251 = sadd.s32 %s250, %s248
        %s252 = smul.addr %s251, 2
        %s253 = scalar_lea.vmem %s1, %s252
        %s254 = smul.u32 2, %s23
        %v255 = vld [vmem:[%s245] sm:$0xff]
        %v256 = vld [vmem:[%s245 + $0x8] sm:$0xff]
        %v257 = vld [vmem:[%s253] sm:$0x3]
        %v258 = vld [vmem:[%s2] sm:$0xf]
        %s259 = scalar_lea.vmem %s2, 4
        %v260 = vld [vmem:[%s259] sm:$0xf]
        %vm264 = vcmask 1046528
        %v265 = vrot.slane %v255, 1
        %v266 = vrot.slane %v256, 1
        %v267 = vsel %vm264, %v265, %v266
        %v268 = vrot.slane %v257, 1
        %v269 = vsel %vm264, %v266, %v268
        %vm270 = vcmask 31744
        %v271 = vsel %vm270, %v267, 0
        %v273 = vsel %vm270, %v269, 0
        %vm275 = vcmask 1043456
        %v277 = vsel %vm275, %v260, 0
        %279 = vmatprep.subr.mxu0 0.0
        %280 = vmatpush1.msra.mxu0 0.0
        %281 = vmatprep.subr.mxu0 0.0
        %282 = vmatpush1.msra.mxu0 0.0
        %283 = vmatprep.subr.mxu0 0.0
        %284 = vmatpush1.msra.mxu0 0.0
        %285 = vmatprep.subr.mxu0 0.0
        %286 = vmatpush1.msra.mxu0 0.0
        %287 = vmatprep.subr.mxu0 0.0
        %288 = vmatpush1.msra.mxu0 0.0
        %289 = vmatprep.subr.mxu0 0.0
        %290 = vmatpush1.msra.mxu0 0.0
        %291 = vmatprep.subr.mxu0 0.0
        %292 = vmatpush1.msra.mxu0 0.0
        %293 = vmatprep.subr.mxu0 0.0
        %294 = vmatpush1.msra.mxu0 0.0
        %295 = vmatprep.subr.mxu0 0.0
        %296 = vmatpush1.msra.mxu0 0.0
        %297 = vmatprep.subr.mxu0 0.0
        %298 = vmatpush1.msra.mxu0 0.0
        %299 = vmatprep.subr.mxu0 0.0
        %300 = vmatpush1.msra.mxu0 0.0
        %301 = vmatprep.subr.mxu0 0.0
        %302 = vmatpush1.msra.mxu0 0.0
        %303 = vmatprep.subr.mxu0 0.0
        %304 = vmatpush1.msra.mxu0 0.0
        %305 = vmatprep.subr.mxu0 0.0
        %306 = vmatpush1.msra.mxu0 0.0
        %307 = vmatprep.subr.mxu0 0.0
        %308 = vmatpush1.msra.mxu0 0.0
        %309 = vmatprep.subr.mxu0 0.0
        %310 = vmatpush1.msra.mxu0 %v277
        %311 = vmatprep.subr.mxu0 0.0
        %312 = vmatpush2.msra.mxu0 0.0
        %313 = vmatprep.subr.mxu0 0.0
        %314 = vmatpush2.msra.mxu0 0.0
        %315 = vmatprep.subr.mxu0 0.0
        %316 = vmatpush2.msra.mxu0 0.0
        %317 = vmatprep.subr.mxu0 0.0
        %318 = vmatpush2.msra.mxu0 0.0
        %319 = vmatprep.subr.mxu0 0.0
        %320 = vmatpush2.msra.mxu0 0.0
        %321 = vmatprep.subr.mxu0 0.0
        %322 = vmatpush2.msra.mxu0 0.0
        %323 = vmatprep.subr.mxu0 0.0
        %324 = vmatpush2.msra.mxu0 0.0
        %325 = vmatprep.subr.mxu0 0.0
        %326 = vmatpush2.msra.mxu0 0.0
        %327 = vmatprep.subr.mxu0 0.0
        %328 = vmatpush2.msra.mxu0 0.0
        %329 = vmatprep.subr.mxu0 0.0
        %330 = vmatpush2.msra.mxu0 0.0
        %331 = vmatprep.subr.mxu0 0.0
        %332 = vmatpush2.msra.mxu0 0.0
        %333 = vmatprep.subr.mxu0 0.0
        %334 = vmatpush2.msra.mxu0 0.0
        %335 = vmatprep.subr.mxu0 0.0
        %336 = vmatpush2.msra.mxu0 0.0
        %337 = vmatprep.subr.mxu0 0.0
        %338 = vmatpush2.msra.mxu0 0.0
        %339 = vmatprep.subr.mxu0 0.0
        %340 = vmatpush2.msra.mxu0 0.0
        %341 = vmatprep.subr.mxu0 0.0
        %342 = vmatpush2.msra.mxu0 0.0
        %343 = vmatprep.mubr.f32.mxu0 0.0
        %344 = vmatmul.mubr.f32.gmra.mxu0 %v271
        %v345 = vpop.f32.mrf.mxu0
        %v346 = vadd.f32 0.0, %v345
        %v347 = vpop.f32.mrf.mxu0
        %348 = vmatprep.mubr.f32.mxu0 0.0
        %349 = vmatmul.mubr.f32.gmra.mxu0 %v273
        %v350 = vpop.f32.mrf.mxu0
        %v351 = vadd.f32 0.0, %v350
        %v352 = vpop.f32.mrf.mxu0
        %353 = vdwg.mxu0
        %v354 = vsel %vm270, %v255, 0
        %v356 = vsel %vm270, %v256, 0
        %v359 = vsel %vm275, %v258, 0
        %361 = vmatprep.subr.mxu0 0.0
        %362 = vmatpush1.msra.mxu0 0.0
        %363 = vmatprep.subr.mxu0 0.0
        %364 = vmatpush1.msra.mxu0 0.0
        %365 = vmatprep.subr.mxu0 0.0
        %366 = vmatpush1.msra.mxu0 0.0
        %367 = vmatprep.subr.mxu0 0.0
        %368 = vmatpush1.msra.mxu0 0.0
        %369 = vmatprep.subr.mxu0 0.0
        %370 = vmatpush1.msra.mxu0 0.0
        %371 = vmatprep.subr.mxu0 0.0
        %372 = vmatpush1.msra.mxu0 0.0
        %373 = vmatprep.subr.mxu0 0.0
        %374 = vmatpush1.msra.mxu0 0.0
        %375 = vmatprep.subr.mxu0 0.0
        %376 = vmatpush1.msra.mxu0 0.0
        %377 = vmatprep.subr.mxu0 0.0
        %378 = vmatpush1.msra.mxu0 0.0
        %379 = vmatprep.subr.mxu0 0.0
        %380 = vmatpush1.msra.mxu0 0.0
        %381 = vmatprep.subr.mxu0 0.0
        %382 = vmatpush1.msra.mxu0 0.0
        %383 = vmatprep.subr.mxu0 0.0
        %384 = vmatpush1.msra.mxu0 0.0
        %385 = vmatprep.subr.mxu0 0.0
        %386 = vmatpush1.msra.mxu0 0.0
        %387 = vmatprep.subr.mxu0 0.0
        %388 = vmatpush1.msra.mxu0 0.0
        %389 = vmatprep.subr.mxu0 0.0
        %390 = vmatpush1.msra.mxu0 0.0
        %391 = vmatprep.subr.mxu0 0.0
        %392 = vmatpush1.msra.mxu0 %v359
        %393 = vmatprep.subr.mxu0 0.0
        %394 = vmatpush2.msra.mxu0 0.0
        %395 = vmatprep.subr.mxu0 0.0
        %396 = vmatpush2.msra.mxu0 0.0
        %397 = vmatprep.subr.mxu0 0.0
        %398 = vmatpush2.msra.mxu0 0.0
        %399 = vmatprep.subr.mxu0 0.0
        %400 = vmatpush2.msra.mxu0 0.0
        %401 = vmatprep.subr.mxu0 0.0
        %402 = vmatpush2.msra.mxu0 0.0
        %403 = vmatprep.subr.mxu0 0.0
        %404 = vmatpush2.msra.mxu0 0.0
        %405 = vmatprep.subr.mxu0 0.0
        %406 = vmatpush2.msra.mxu0 0.0
        %407 = vmatprep.subr.mxu0 0.0
        %408 = vmatpush2.msra.mxu0 0.0
        %409 = vmatprep.subr.mxu0 0.0
        %410 = vmatpush2.msra.mxu0 0.0
        %411 = vmatprep.subr.mxu0 0.0
        %412 = vmatpush2.msra.mxu0 0.0
        %413 = vmatprep.subr.mxu0 0.0
        %414 = vmatpush2.msra.mxu0 0.0
        %415 = vmatprep.subr.mxu0 0.0
        %416 = vmatpush2.msra.mxu0 0.0
        %417 = vmatprep.subr.mxu0 0.0
        %418 = vmatpush2.msra.mxu0 0.0
        %419 = vmatprep.subr.mxu0 0.0
        %420 = vmatpush2.msra.mxu0 0.0
        %421 = vmatprep.subr.mxu0 0.0
        %422 = vmatpush2.msra.mxu0 0.0
        %423 = vmatprep.subr.mxu0 0.0
        %424 = vmatpush2.msra.mxu0 0.0
        %425 = vmatprep.mubr.f32.mxu0 0.0
        %426 = vmatmul.mubr.f32.gmra.mxu0 %v354
        %v427 = vpop.f32.mrf.mxu0
        %v428 = vadd.f32 %v346, %v427
        %v429 = vpop.f32.mrf.mxu0
        %430 = vmatprep.mubr.f32.mxu0 0.0
        %431 = vmatmul.mubr.f32.gmra.mxu0 %v356
        %v432 = vpop.f32.mrf.mxu0
        %v433 = vadd.f32 %v351, %v432
        %v434 = vpop.f32.mrf.mxu0
        %435 = vdwg.mxu0
        %s436 = scalar_lea.vmem %s2, 8
        %v437 = vld [vmem:[%s436] sm:$0xf]
        %vm438 = vcmask 1045504
        %v439 = vrot.slane %v255, 2
        %v440 = vrot.slane %v256, 2
        %v441 = vsel %vm438, %v439, %v440
        %v442 = vrot.slane %v257, 2
        %v443 = vsel %vm438, %v440, %v442
        %v444 = vsel %vm270, %v441, 0
        %v446 = vsel %vm270, %v443, 0
        %v449 = vsel %vm275, %v437, 0
        %451 = vmatprep.subr.mxu0 0.0
        %452 = vmatpush1.msra.mxu0 0.0
        %453 = vmatprep.subr.mxu0 0.0
        %454 = vmatpush1.msra.mxu0 0.0
        %455 = vmatprep.subr.mxu0 0.0
        %456 = vmatpush1.msra.mxu0 0.0
        %457 = vmatprep.subr.mxu0 0.0
        %458 = vmatpush1.msra.mxu0 0.0
        %459 = vmatprep.subr.mxu0 0.0
        %460 = vmatpush1.msra.mxu0 0.0
        %461 = vmatprep.subr.mxu0 0.0
        %462 = vmatpush1.msra.mxu0 0.0
        %463 = vmatprep.subr.mxu0 0.0
        %464 = vmatpush1.msra.mxu0 0.0
        %465 = vmatprep.subr.mxu0 0.0
        %466 = vmatpush1.msra.mxu0 0.0
        %467 = vmatprep.subr.mxu0 0.0
        %468 = vmatpush1.msra.mxu0 0.0
        %469 = vmatprep.subr.mxu0 0.0
        %470 = vmatpush1.msra.mxu0 0.0
        %471 = vmatprep.subr.mxu0 0.0
        %472 = vmatpush1.msra.mxu0 0.0
        %473 = vmatprep.subr.mxu0 0.0
        %474 = vmatpush1.msra.mxu0 0.0
        %475 = vmatprep.subr.mxu0 0.0
        %476 = vmatpush1.msra.mxu0 0.0
        %477 = vmatprep.subr.mxu0 0.0
        %478 = vmatpush1.msra.mxu0 0.0
        %479 = vmatprep.subr.mxu0 0.0
        %480 = vmatpush1.msra.mxu0 0.0
        %481 = vmatprep.subr.mxu0 0.0
        %482 = vmatpush1.msra.mxu0 %v449
        %483 = vmatprep.subr.mxu0 0.0
        %484 = vmatpush2.msra.mxu0 0.0
        %485 = vmatprep.subr.mxu0 0.0
        %486 = vmatpush2.msra.mxu0 0.0
        %487 = vmatprep.subr.mxu0 0.0
        %488 = vmatpush2.msra.mxu0 0.0
        %489 = vmatprep.subr.mxu0 0.0
        %490 = vmatpush2.msra.mxu0 0.0
        %491 = vmatprep.subr.mxu0 0.0
        %492 = vmatpush2.msra.mxu0 0.0
        %493 = vmatprep.subr.mxu0 0.0
        %494 = vmatpush2.msra.mxu0 0.0
        %495 = vmatprep.subr.mxu0 0.0
        %496 = vmatpush2.msra.mxu0 0.0
        %497 = vmatprep.subr.mxu0 0.0
        %498 = vmatpush2.msra.mxu0 0.0
        %499 = vmatprep.subr.mxu0 0.0
        %500 = vmatpush2.msra.mxu0 0.0
        %501 = vmatprep.subr.mxu0 0.0
        %502 = vmatpush2.msra.mxu0 0.0
        %503 = vmatprep.subr.mxu0 0.0
        %504 = vmatpush2.msra.mxu0 0.0
        %505 = vmatprep.subr.mxu0 0.0
        %506 = vmatpush2.msra.mxu0 0.0
        %507 = vmatprep.subr.mxu0 0.0
        %508 = vmatpush2.msra.mxu0 0.0
        %509 = vmatprep.subr.mxu0 0.0
        %510 = vmatpush2.msra.mxu0 0.0
        %511 = vmatprep.subr.mxu0 0.0
        %512 = vmatpush2.msra.mxu0 0.0
        %513 = vmatprep.subr.mxu0 0.0
        %514 = vmatpush2.msra.mxu0 0.0
        %515 = vmatprep.mubr.f32.mxu0 0.0
        %516 = vmatmul.mubr.f32.gmra.mxu0 %v444
        %v517 = vpop.f32.mrf.mxu0
        %v518 = vadd.f32 0.0, %v517
        %v519 = vpop.f32.mrf.mxu0
        %520 = vmatprep.mubr.f32.mxu0 0.0
        %521 = vmatmul.mubr.f32.gmra.mxu0 %v446
        %v522 = vpop.f32.mrf.mxu0
        %v523 = vadd.f32 0.0, %v522
        %v524 = vpop.f32.mrf.mxu0
        %525 = vdwg.mxu0
        %v526 = vadd.f32 %v428, %v518
        %v527 = vadd.f32 %v433, %v523
        %v528 = vld [vmem:[%s3] sm:$0x1]
        %v530 = vlaneseq
        %v531 = vshrl.u32 %v530, 7
        %v532 = vsub.s32 0, %v531
        %v533 = vrot.slane %v528, %v532
        %v535 = vadd.f32 %v526, %v533
        %v536 = vadd.f32 %v527, %v533
        %v537 = vmax.f32 %v535, 0.0
        %v538 = vmax.f32 %v536, 0.0
        %539 = vst [vmem:[%s236] sm:$0xff] %v537
        %540 = vst [vmem:[%s236 + $0x8] sm:$0xff] %v538
        %s541 = sand.u32 %s138, 1
        %s542 = scalar_lea.sflag [#allocation3], %s541
        %s543 = sand.u32 %s138, 1
        %s544 = smul.addr %s543, 16
        %s545 = scalar_lea.vmem [#allocation2], %s544
        // Predicated region
        $region37: #{tpu_custom_call.1} parent=35 // pred_check
          %p546 = pneg %p148
        $region38: #{tpu_custom_call.1} parent=35 // pred_check_branch
          %548 = sbr.rel (%p546) target = $region40
        $region39: #{tpu_custom_call.1} parent=35 // pred_region
          %s549 = smul.u32 2, %s23
          %s551 = ssub.s32 256, 256
          %552 = vsyncadd %s542, %s551
          %s553 = smul.addr %s22, 2
          %s554 = sadd.s32 %s549, %s553
          %s555 = smul.addr %s554, 128
          %s556 = scalar_lea.hbm %s4, %s555
          %s557 = sshll.u32 %s545, 4
          %s558 = int_to_ptr.vmem [resolvable:$true] %s557
          %563 = dma.vmem_to_hbm [thread:$0]  %s558, 256, %s556, %s542, 128, 128, 8
        $region40: #{tpu_custom_call.1} parent=35 // pred_fallthru
          _
      $region36: #{tpu_custom_call.1} parent=5 // pred_fallthru
        _
      %p564 = scmp.le.s32.totalorder 2, %s13
      // Predicated region
      $region41: #{tpu_custom_call.1} parent=5 // pred_check
        %p565 = pneg %p564
      $region42: #{tpu_custom_call.1} parent=5 // pred_check_branch
        %567 = sbr.rel (%p565) target = $region44
      $region43: #{tpu_custom_call.1} parent=5 // pred_region
        %s568 = ssub.s32 %s13, 2
        // Predicated region
        $region45: #{tpu_custom_call.1} parent=43 // pred_check
          %p569 = pneg %p154
        $region46: #{tpu_custom_call.1} parent=43 // pred_check_branch
          %571 = sbr.rel (%p569) target = $region48
        $region47: #{tpu_custom_call.1} parent=43 // pred_region
          %s572 = sand.u32 %s139, 1
          %s573 = scalar_lea.sflag [#allocation3], %s572
          %s574 = sand.u32 %s139, 1
          %s575 = smul.addr %s574, 16
          %s576 = scalar_lea.vmem [#allocation2], %s575
          %577 = dma.done %s573, 256
        $region48: #{tpu_custom_call.1} parent=43 // pred_fallthru
          _
      $region44: #{tpu_custom_call.1} parent=5 // pred_fallthru
        _
    $region6: #{tpu_custom_call.1} parent=1 // loop_footer
      %s17 = sadd.s32 1, %s13
    $region7: #{tpu_custom_call.1} parent=1 // loop_footer_branch
      %12 = sbr.rel target = $region3
    $region8: #{tpu_custom_call.1} parent=1 // loop_exit
      _
    %578 = vsyncpa [#allocation3], 1
    %s579 = scalar_lea.sflag [#allocation3], 1
    %580 = vsyncpa %s579, 1

// kernel: tpu_custom_call.1
$region0: #{tpu_custom_call.1}
  #allocation0 [shape = 'u32[]', space=smem, size = 0x4, offset = 0x4, fixed_abs, tag = 'smem constant byte address 0x4 - core index']
  #allocation1 [shape = 'u32[144,128]{1,0:T(1,128)}', space=vmem, size = 0x12000, scoped, tag = 'internal scratch']
  %s0 = inlined_call_operand.vmem [shape: f32[2,16,4], index: 0, kind: input, shape index: {}]
  %s1 = inlined_call_operand.vmem [shape: f32[2,1,2,4], index: 1, kind: input, shape index: {}]
  %s2 = inlined_call_operand.vmem [shape: f32[3,4,128], index: 2, kind: input, shape index: {}]
  %s3 = inlined_call_operand.vmem [shape: f32[1,128], index: 3, kind: input, shape index: {}]
  %s4 = inlined_call_operand.hbm [shape: f32[2,16,128], index: 4, kind: output, shape index: {}]
  %s5 = sld [smem:[#allocation0]]
  $region49: #{tpu_custom_call.1} parent=0
    _
  %s7 = ssub.s32 1, %s5
  %s8 = scalar_select 0, %s7, %s5
  $region1: #{tpu_custom_call.1} parent=0
    #allocation2 [shape = 'u8[16384]{0}', space=vmem, size = 0x4000, scoped, tag = 'output window, operand 0']
    #allocation3 [shape = 's32[2]{0}', space=sflag, size = 0x8, scoped, tag = 'scoped memory for tpu_custom_call.1']
    %9 = vsyncpa [#allocation3], 0
    %s10 = scalar_lea.sflag [#allocation3], 1
    %11 = vsyncpa %s10, 0
    loop: start=0, step=1, limit=4
    $region2: #{tpu_custom_call.1} parent=1 // loop_pre_header
      _
    $region3: #{tpu_custom_call.1} parent=1 // loop_header
      %s13 = sphi 0, %s17
      %p14 = scmp.ge.s32.totalorder %s13, 4
      %s20 = sphi 0, %s32
      %s21 = sphi 0, %s28
      %s22 = sphi 0, %s20
      %s23 = sphi 0, %s21
      %s24 = sphi 0, %s22
      %s25 = sphi 0, %s23
      %s37 = sphi 0, %s39
      %s40 = sphi 0, %s37
      %s41 = sphi 0, %s40
      %s57 = sphi 0, %s41
      %s65 = sphi 0, %s67
      %s68 = sphi 0, %s65
      %s69 = sphi 0, %s68
      %s85 = sphi 0, %s69
      %s89 = sphi 0, %s89
      %s91 = sphi 0, %s89
      %s92 = sphi 0, %s91
      %s106 = sphi 0, %s92
      %s110 = sphi 0, %s110
      %s112 = sphi 0, %s110
      %s113 = sphi 0, %s112
      %s127 = sphi 0, %s113
      %s135 = sphi 0, %s137
      %s138 = sphi 0, %s135
      %s139 = sphi 0, %s138
      %s155 = sphi 0, %s139
    $region4: #{tpu_custom_call.1} parent=1 // loop_header_branch
      %16 = sbr.rel (%p14) target = $region8
    $region5: #{tpu_custom_call.1} parent=1 // loop_body
      %s18 = ssub.s32 %s13, 1
      %s19 = ssub.s32 %s13, 2
      %s26 = sadd.s32 1, %s21
      %p27 = scmp.ge.s32.totalorder %s26, 1
      %s28 = scalar_select %p27, 0, %s26
      %s29 = sadd.s32 1, %s20
      %s30 = scalar_select %p27, %s29, %s20
      %p31 = scmp.ge.s32.totalorder %s30, 2
      %s32 = scalar_select %p31, 0, %s30
      %s33 = ssub.s32 %s20, %s32
      %s34 = ssub.s32 %s21, %s28
      %s35 = sor.u32 %s33, %s34
      %p36 = scmp.eq.s32.totalorder %s35, 0
      %s38 = sadd.s32 %s37, 1
      %s39 = scalar_select %p36, %s37, %s38
      %p42 = pneg %p36
      %p43 = scmp.eq.s32.totalorder %s13, 1
      %p44 = por %p42, %p43
      %p45 = scmp.ne.s32.totalorder %s37, %s40
      %p46 = scmp.eq.s32.totalorder %s13, 0
      %p47 = por %p45, %p46
      %p48 = scmp.ne.s32.totalorder %s37, %s40
      %p49 = scmp.eq.s32.totalorder %s18, 1
      %p50 = por %p48, %p49
      %p51 = scmp.ne.s32.totalorder %s40, %s41
      %p52 = scmp.eq.s32.totalorder %s18, 0
      %p53 = por %p51, %p52
      %p54 = scmp.ne.s32.totalorder %s40, %s41
      %p55 = scmp.eq.s32.totalorder %s19, 1
      %p56 = por %p54, %p55
      %p58 = scmp.ne.s32.totalorder %s41, %s57
      %p59 = scmp.eq.s32.totalorder %s19, 0
      %p60 = por %p58, %p59
      %s61 = ssub.s32 %s20, %s32
      %s62 = ssub.s32 %s21, %s28
      %s63 = sor.u32 %s61, %s62
      %p64 = scmp.eq.s32.totalorder %s63, 0
      %s66 = sadd.s32 %s65, 1
      %s67 = scalar_select %p64, %s65, %s66
      %p70 = pneg %p64
      %p71 = scmp.eq.s32.totalorder %s13, 1
      %p72 = por %p70, %p71
      %p73 = scmp.ne.s32.totalorder %s65, %s68
      %p74 = scmp.eq.s32.totalorder %s13, 0
      %p75 = por %p73, %p74
      %p76 = scmp.ne.s32.totalorder %s65, %s68
      %p77 = scmp.eq.s32.totalorder %s18, 1
      %p78 = por %p76, %p77
      %p79 = scmp.ne.s32.totalorder %s68, %s69
      %p80 = scmp.eq.s32.totalorder %s18, 0
      %p81 = por %p79, %p80
      %p82 = scmp.ne.s32.totalorder %s68, %s69
      %p83 = scmp.eq.s32.totalorder %s19, 1
      %p84 = por %p82, %p83
      %p86 = scmp.ne.s32.totalorder %s69, %s85
      %p87 = scmp.eq.s32.totalorder %s19, 0
      %p88 = por %p86, %p87
      %s90 = sadd.s32 %s89, 1
      %p93 = scmp.eq.s32.totalorder %s13, 1
      %p94 = scmp.ne.s32.totalorder %s89, %s91
      %p95 = scmp.eq.s32.totalorder %s13, 0
      %p96 = por %p94, %p95
      %p97 = scmp.ne.s32.totalorder %s89, %s91
      %p98 = scmp.eq.s32.totalorder %s18, 1
      %p99 = por %p97, %p98
      %p100 = scmp.ne.s32.totalorder %s91, %s92
      %p101 = scmp.eq.s32.totalorder %s18, 0
      %p102 = por %p100, %p101
      %p103 = scmp.ne.s32.totalorder %s91, %s92
      %p104 = scmp.eq.s32.totalorder %s19, 1
      %p105 = por %p103, %p104
      %p107 = scmp.ne.s32.totalorder %s92, %s106
      %p108 = scmp.eq.s32.totalorder %s19, 0
      %p109 = por %p107, %p108
      %s111 = sadd.s32 %s110, 1
      %p114 = scmp.eq.s32.totalorder %s13, 1
      %p115 = scmp.ne.s32.totalorder %s110, %s112
      %p116 = scmp.eq.s32.totalorder %s13, 0
      %p117 = por %p115, %p116
      %p118 = scmp.ne.s32.totalorder %s110, %s112
      %p119 = scmp.eq.s32.totalorder %s18, 1
      %p120 = por %p118, %p119
      %p121 = scmp.ne.s32.totalorder %s112, %s113
      %p122 = scmp.eq.s32.totalorder %s18, 0
      %p123 = por %p121, %p122
      %p124 = scmp.ne.s32.totalorder %s112, %s113
      %p125 = scmp.eq.s32.totalorder %s19, 1
      %p126 = por %p124, %p125
      %p128 = scmp.ne.s32.totalorder %s113, %s127
      %p129 = scmp.eq.s32.totalorder %s19, 0
      %p130 = por %p128, %p129
      %s131 = ssub.s32 %s20, %s32
      %s132 = ssub.s32 %s21, %s28
      %s133 = sor.u32 %s131, %s132
      %p134 = scmp.eq.s32.totalorder %s133, 0
      %s136 = sadd.s32 %s135, 1
      %s137 = scalar_select %p134, %s135, %s136
      %p140 = pneg %p134
      %p141 = scmp.eq.s32.totalorder %s13, 1
      %p142 = por %p140, %p141
      %p143 = scmp.ne.s32.totalorder %s135, %s138
      %p144 = scmp.eq.s32.totalorder %s13, 0
      %p145 = por %p143, %p144
      %p146 = scmp.ne.s32.totalorder %s135, %s138
      %p147 = scmp.eq.s32.totalorder %s18, 1
      %p148 = por %p146, %p147
      %p149 = scmp.ne.s32.totalorder %s138, %s139
      %p150 = scmp.eq.s32.totalorder %s18, 0
      %p151 = por %p149, %p150
      %p152 = scmp.ne.s32.totalorder %s138, %s139
      %p153 = scmp.eq.s32.totalorder %s19, 1
      %p154 = por %p152, %p153
      %p156 = scmp.ne.s32.totalorder %s139, %s155
      %p157 = scmp.eq.s32.totalorder %s19, 0
      %p158 = por %p156, %p157
      %p159 = scmp.le.s32.totalorder 1, %s13
      %p160 = scmp.lt.s32.totalorder %s13, 3
      %p161 = pnand %p159, %p160
      %p162 = pneg %p161
      // Predicated region
      $region9: #{tpu_custom_call.1} parent=5 // pred_check
        _
      $region10: #{tpu_custom_call.1} parent=5 // pred_check_branch
        %164 = sbr.rel (%p161) target = $region12
      $region11: #{tpu_custom_call.1} parent=5 // pred_region
        %s165 = ssub.s32 %s13, 1
        // Predicated region
        $region13: #{tpu_custom_call.1} parent=11 // pred_check
          %p166 = pneg %p102
        $region14: #{tpu_custom_call.1} parent=11 // pred_check_branch
          %168 = sbr.rel (%p166) target = $region16
        $region15: #{tpu_custom_call.1} parent=11 // pred_region
          _
        $region16: #{tpu_custom_call.1} parent=11 // pred_fallthru
          _
        // Predicated region
        $region17: #{tpu_custom_call.1} parent=11 // pred_check
          %p169 = pneg %p123
        $region18: #{tpu_custom_call.1} parent=11 // pred_check_branch
          %171 = sbr.rel (%p169) target = $region20
        $region19: #{tpu_custom_call.1} parent=11 // pred_region
          _
        $region20: #{tpu_custom_call.1} parent=11 // pred_fallthru
          _
      $region12: #{tpu_custom_call.1} parent=5 // pred_fallthru
        _
      %p172 = scmp.lt.s32.totalorder %s13, 2
      // Predicated region
      $region21: #{tpu_custom_call.1} parent=5 // pred_check
        %p173 = pneg %p172
      $region22: #{tpu_custom_call.1} parent=5 // pred_check_branch
        %175 = sbr.rel (%p173) target = $region24
      $region23: #{tpu_custom_call.1} parent=5 // pred_region
        // Predicated region
        $region25: #{tpu_custom_call.1} parent=23 // pred_check
          %p176 = pneg %p47
        $region26: #{tpu_custom_call.1} parent=23 // pred_check_branch
          %178 = sbr.rel (%p176) target = $region28
        $region27: #{tpu_custom_call.1} parent=23 // pred_region
          %s179 = smul.u32 2, %s21
          %p180 = scmp.lt.s32.totalorder %s20, 1
          %s181 = scalar_select %p180, %s20, 1
          %p182 = scmp.lt.s32.totalorder %s179, 1
          %s183 = scalar_select %p182, %s179, 1
          %s184 = smul.addr %s181, 2
          %s185 = sadd.s32 %s183, %s184
          %s186 = smul.addr %s185, 8
          %s187 = scalar_lea.vmem %s0, %s186
          %s188 = smul.u32 2, %s21
        $region28: #{tpu_custom_call.1} parent=23 // pred_fallthru
          _
        // Predicated region
        $region29: #{tpu_custom_call.1} parent=23 // pred_check
          %p189 = pneg %p75
        $region30: #{tpu_custom_call.1} parent=23 // pred_check_branch
          %191 = sbr.rel (%p189) target = $region32
        $region31: #{tpu_custom_call.1} parent=23 // pred_region
          %p192 = scmp.lt.s32.totalorder %s20, 1
          %s193 = scalar_select %p192, %s20, 1
          %p194 = scmp.lt.s32.totalorder %s21, 0
          %s195 = scalar_select %p194, %s21, 0
          %s196 = sadd.s32 %s195, %s193
          %s197 = smul.addr %s196, 2
          %s198 = scalar_lea.vmem %s1, %s197
        $region32: #{tpu_custom_call.1} parent=23 // pred_fallthru
          _
      $region24: #{tpu_custom_call.1} parent=5 // pred_fallthru
        _
      %p199 = scmp.le.s32.totalorder 1, %s13
      %p200 = scmp.lt.s32.totalorder %s13, 3
      %p201 = pnand %p199, %p200
      %p202 = pneg %p201
      // Predicated region
      $region33: #{tpu_custom_call.1} parent=5 // pred_check
        _
      $region34: #{tpu_custom_call.1} parent=5 // pred_check_branch
        %204 = sbr.rel (%p201) target = $region36
      $region35: #{tpu_custom_call.1} parent=5 // pred_region
        %s205 = ssub.s32 %s13, 1
        %s206 = smul.u32 2, %s23
        %p207 = scmp.lt.s32.totalorder %s22, 1
        %s208 = scalar_select %p207, %s22, 1
        %p209 = scmp.lt.s32.totalorder %s206, 1
        %s210 = scalar_select %p209, %s206, 1
        %s211 = smul.addr %s208, 2
        %s212 = sadd.s32 %s210, %s211
        %s213 = smul.addr %s212, 8
        %s214 = scalar_lea.vmem %s0, %s213
        %p215 = pneg %p53
        %p216 = pneg %p50
        %p217 = scmp.lt.s32.totalorder %s22, 1
        %s218 = scalar_select %p217, %s22, 1
        %p219 = scmp.lt.s32.totalorder %s23, 0
        %s220 = scalar_select %p219, %s23, 0
        %s221 = sadd.s32 %s220, %s218
        %s222 = smul.addr %s221, 2
        %s223 = scalar_lea.vmem %s1, %s222
        %p224 = pneg %p81
        %p225 = pneg %p78
        %p226 = pneg %p102
        %p227 = pneg %p99
        %p228 = pneg %p123
        %p229 = pneg %p120
        %p230 = pneg %p151
        %p231 = pneg %p148
        %s232 = sand.u32 %s138, 1
        %s233 = scalar_lea.sflag [#allocation3], %s232
        %s234 = sand.u32 %s138, 1
        %s235 = smul.addr %s234, 16
        %s236 = scalar_lea.vmem [#allocation2], %s235
        %s237 = smul.u32 2, %s23
        %p238 = scmp.lt.s32.totalorder %s22, 1
        %s239 = scalar_select %p238, %s22, 1
        %p240 = scmp.lt.s32.totalorder %s237, 1
        %s241 = scalar_select %p240, %s237, 1
        %s242 = smul.addr %s239, 2
        %s243 = sadd.s32 %s241, %s242
        %s244 = smul.addr %s243, 8
        %s245 = scalar_lea.vmem %s0, %s244
        %s246 = smul.u32 2, %s23
        %p247 = scmp.lt.s32.totalorder %s22, 1
        %s248 = scalar_select %p247, %s22, 1
        %p249 = scmp.lt.s32.totalorder %s23, 0
        %s250 = scalar_select %p249, %s23, 0
        %s251 = sadd.s32 %s250, %s248
        %s252 = smul.addr %s251, 2
        %s253 = scalar_lea.vmem %s1, %s252
        %s254 = smul.u32 2, %s23
        %v255 = vld [vmem:[%s245] sm:$0xff]
        %v256 = vld [vmem:[%s245 + $0x8] sm:$0xff]
        %v257 = vld [vmem:[%s253] sm:$0x3]
        %v258 = vld [vmem:[%s2] sm:$0xf]
        %s259 = scalar_lea.vmem %s2, 4
        %v260 = vld [vmem:[%s259] sm:$0xf]
        %vm264 = vcmask 1046528
        %v265 = vrot.slane %v255, 1
        %v266 = vrot.slane %v256, 1
        %v267 = vsel %vm264, %v265, %v266
        %v268 = vrot.slane %v257, 1
        %v269 = vsel %vm264, %v266, %v268
        %vm270 = vcmask 31744
        %v271 = vsel %vm270, %v267, 0
        %v273 = vsel %vm270, %v269, 0
        %vm275 = vcmask 1043456
        %v277 = vsel %vm275, %v260, 0
        %279 = vmatprep.subr.mxu0 0.0
        %280 = vmatpush1.msra.mxu0 0.0
        %281 = vmatprep.subr.mxu0 0.0
        %282 = vmatpush1.msra.mxu0 0.0
        %283 = vmatprep.subr.mxu0 0.0
        %284 = vmatpush1.msra.mxu0 0.0
        %285 = vmatprep.subr.mxu0 0.0
        %286 = vmatpush1.msra.mxu0 0.0
        %287 = vmatprep.subr.mxu0 0.0
        %288 = vmatpush1.msra.mxu0 0.0
        %289 = vmatprep.subr.mxu0 0.0
        %290 = vmatpush1.msra.mxu0 0.0
        %291 = vmatprep.subr.mxu0 0.0
        %292 = vmatpush1.msra.mxu0 0.0
        %293 = vmatprep.subr.mxu0 0.0
        %294 = vmatpush1.msra.mxu0 0.0
        %295 = vmatprep.subr.mxu0 0.0
        %296 = vmatpush1.msra.mxu0 0.0
        %297 = vmatprep.subr.mxu0 0.0
        %298 = vmatpush1.msra.mxu0 0.0
        %299 = vmatprep.subr.mxu0 0.0
        %300 = vmatpush1.msra.mxu0 0.0
        %301 = vmatprep.subr.mxu0 0.0
        %302 = vmatpush1.msra.mxu0 0.0
        %303 = vmatprep.subr.mxu0 0.0
        %304 = vmatpush1.msra.mxu0 0.0
        %305 = vmatprep.subr.mxu0 0.0
        %306 = vmatpush1.msra.mxu0 0.0
        %307 = vmatprep.subr.mxu0 0.0
        %308 = vmatpush1.msra.mxu0 0.0
        %309 = vmatprep.subr.mxu0 0.0
        %310 = vmatpush1.msra.mxu0 %v277
        %311 = vmatprep.subr.mxu0 0.0
        %312 = vmatpush2.msra.mxu0 0.0
        %313 = vmatprep.subr.mxu0 0.0
        %314 = vmatpush2.msra.mxu0 0.0
        %315 = vmatprep.subr.mxu0 0.0
        %316 = vmatpush2.msra.mxu0 0.0
        %317 = vmatprep.subr.mxu0 0.0
        %318 = vmatpush2.msra.mxu0 0.0
        %319 = vmatprep.subr.mxu0 0.0
        %320 = vmatpush2.msra.mxu0 0.0
        %321 = vmatprep.subr.mxu0 0.0
        %322 = vmatpush2.msra.mxu0 0.0
        %323 = vmatprep.subr.mxu0 0.0
        %324 = vmatpush2.msra.mxu0 0.0
        %325 = vmatprep.subr.mxu0 0.0
        %326 = vmatpush2.msra.mxu0 0.0
        %327 = vmatprep.subr.mxu0 0.0
        %328 = vmatpush2.msra.mxu0 0.0
        %329 = vmatprep.subr.mxu0 0.0
        %330 = vmatpush2.msra.mxu0 0.0
        %331 = vmatprep.subr.mxu0 0.0
        %332 = vmatpush2.msra.mxu0 0.0
        %333 = vmatprep.subr.mxu0 0.0
        %334 = vmatpush2.msra.mxu0 0.0
        %335 = vmatprep.subr.mxu0 0.0
        %336 = vmatpush2.msra.mxu0 0.0
        %337 = vmatprep.subr.mxu0 0.0
        %338 = vmatpush2.msra.mxu0 0.0
        %339 = vmatprep.subr.mxu0 0.0
        %340 = vmatpush2.msra.mxu0 0.0
        %341 = vmatprep.subr.mxu0 0.0
        %342 = vmatpush2.msra.mxu0 0.0
        %343 = vmatprep.mubr.f32.mxu0 0.0
        %344 = vmatmul.mubr.f32.gmra.mxu0 %v271
        %v345 = vpop.f32.mrf.mxu0
        %v346 = vadd.f32 0.0, %v345
        %v347 = vpop.f32.mrf.mxu0
        %348 = vmatprep.mubr.f32.mxu0 0.0
        %349 = vmatmul.mubr.f32.gmra.mxu0 %v273
        %v350 = vpop.f32.mrf.mxu0
        %v351 = vadd.f32 0.0, %v350
        %v352 = vpop.f32.mrf.mxu0
        %353 = vdwg.mxu0
        %v354 = vsel %vm270, %v255, 0
        %v356 = vsel %vm270, %v256, 0
        %v359 = vsel %vm275, %v258, 0
        %361 = vmatprep.subr.mxu0 0.0
        %362 = vmatpush1.msra.mxu0 0.0
        %363 = vmatprep.subr.mxu0 0.0
        %364 = vmatpush1.msra.mxu0 0.0
        %365 = vmatprep.subr.mxu0 0.0
        %366 = vmatpush1.msra.mxu0 0.0
        %367 = vmatprep.subr.mxu0 0.0
        %368 = vmatpush1.msra.mxu0 0.0
        %369 = vmatprep.subr.mxu0 0.0
        %370 = vmatpush1.msra.mxu0 0.0
        %371 = vmatprep.subr.mxu0 0.0
        %372 = vmatpush1.msra.mxu0 0.0
        %373 = vmatprep.subr.mxu0 0.0
        %374 = vmatpush1.msra.mxu0 0.0
        %375 = vmatprep.subr.mxu0 0.0
        %376 = vmatpush1.msra.mxu0 0.0
        %377 = vmatprep.subr.mxu0 0.0
        %378 = vmatpush1.msra.mxu0 0.0
        %379 = vmatprep.subr.mxu0 0.0
        %380 = vmatpush1.msra.mxu0 0.0
        %381 = vmatprep.subr.mxu0 0.0
        %382 = vmatpush1.msra.mxu0 0.0
        %383 = vmatprep.subr.mxu0 0.0
        %384 = vmatpush1.msra.mxu0 0.0
        %385 = vmatprep.subr.mxu0 0.0
        %386 = vmatpush1.msra.mxu0 0.0
        %387 = vmatprep.subr.mxu0 0.0
        %388 = vmatpush1.msra.mxu0 0.0
        %389 = vmatprep.subr.mxu0 0.0
        %390 = vmatpush1.msra.mxu0 0.0
        %391 = vmatprep.subr.mxu0 0.0
        %392 = vmatpush1.msra.mxu0 %v359
        %393 = vmatprep.subr.mxu0 0.0
        %394 = vmatpush2.msra.mxu0 0.0
        %395 = vmatprep.subr.mxu0 0.0
        %396 = vmatpush2.msra.mxu0 0.0
        %397 = vmatprep.subr.mxu0 0.0
        %398 = vmatpush2.msra.mxu0 0.0
        %399 = vmatprep.subr.mxu0 0.0
        %400 = vmatpush2.msra.mxu0 0.0
        %401 = vmatprep.subr.mxu0 0.0
        %402 = vmatpush2.msra.mxu0 0.0
        %403 = vmatprep.subr.mxu0 0.0
        %404 = vmatpush2.msra.mxu0 0.0
        %405 = vmatprep.subr.mxu0 0.0
        %406 = vmatpush2.msra.mxu0 0.0
        %407 = vmatprep.subr.mxu0 0.0
        %408 = vmatpush2.msra.mxu0 0.0
        %409 = vmatprep.subr.mxu0 0.0
        %410 = vmatpush2.msra.mxu0 0.0
        %411 = vmatprep.subr.mxu0 0.0
        %412 = vmatpush2.msra.mxu0 0.0
        %413 = vmatprep.subr.mxu0 0.0
        %414 = vmatpush2.msra.mxu0 0.0
        %415 = vmatprep.subr.mxu0 0.0
        %416 = vmatpush2.msra.mxu0 0.0
        %417 = vmatprep.subr.mxu0 0.0
        %418 = vmatpush2.msra.mxu0 0.0
        %419 = vmatprep.subr.mxu0 0.0
        %420 = vmatpush2.msra.mxu0 0.0
        %421 = vmatprep.subr.mxu0 0.0
        %422 = vmatpush2.msra.mxu0 0.0
        %423 = vmatprep.subr.mxu0 0.0
        %424 = vmatpush2.msra.mxu0 0.0
        %425 = vmatprep.mubr.f32.mxu0 0.0
        %426 = vmatmul.mubr.f32.gmra.mxu0 %v354
        %v427 = vpop.f32.mrf.mxu0
        %v428 = vadd.f32 %v346, %v427
        %v429 = vpop.f32.mrf.mxu0
        %430 = vmatprep.mubr.f32.mxu0 0.0
        %431 = vmatmul.mubr.f32.gmra.mxu0 %v356
        %v432 = vpop.f32.mrf.mxu0
        %v433 = vadd.f32 %v351, %v432
        %v434 = vpop.f32.mrf.mxu0
        %435 = vdwg.mxu0
        %s436 = scalar_lea.vmem %s2, 8
        %v437 = vld [vmem:[%s436] sm:$0xf]
        %vm438 = vcmask 1045504
        %v439 = vrot.slane %v255, 2
        %v440 = vrot.slane %v256, 2
        %v441 = vsel %vm438, %v439, %v440
        %v442 = vrot.slane %v257, 2
        %v443 = vsel %vm438, %v440, %v442
        %v444 = vsel %vm270, %v441, 0
        %v446 = vsel %vm270, %v443, 0
        %v449 = vsel %vm275, %v437, 0
        %451 = vmatprep.subr.mxu0 0.0
        %452 = vmatpush1.msra.mxu0 0.0
        %453 = vmatprep.subr.mxu0 0.0
        %454 = vmatpush1.msra.mxu0 0.0
        %455 = vmatprep.subr.mxu0 0.0
        %456 = vmatpush1.msra.mxu0 0.0
        %457 = vmatprep.subr.mxu0 0.0
        %458 = vmatpush1.msra.mxu0 0.0
        %459 = vmatprep.subr.mxu0 0.0
        %460 = vmatpush1.msra.mxu0 0.0
        %461 = vmatprep.subr.mxu0 0.0
        %462 = vmatpush1.msra.mxu0 0.0
        %463 = vmatprep.subr.mxu0 0.0
        %464 = vmatpush1.msra.mxu0 0.0
        %465 = vmatprep.subr.mxu0 0.0
        %466 = vmatpush1.msra.mxu0 0.0
        %467 = vmatprep.subr.mxu0 0.0
        %468 = vmatpush1.msra.mxu0 0.0
        %469 = vmatprep.subr.mxu0 0.0
        %470 = vmatpush1.msra.mxu0 0.0
        %471 = vmatprep.subr.mxu0 0.0
        %472 = vmatpush1.msra.mxu0 0.0
        %473 = vmatprep.subr.mxu0 0.0
        %474 = vmatpush1.msra.mxu0 0.0
        %475 = vmatprep.subr.mxu0 0.0
        %476 = vmatpush1.msra.mxu0 0.0
        %477 = vmatprep.subr.mxu0 0.0
        %478 = vmatpush1.msra.mxu0 0.0
        %479 = vmatprep.subr.mxu0 0.0
        %480 = vmatpush1.msra.mxu0 0.0
        %481 = vmatprep.subr.mxu0 0.0
        %482 = vmatpush1.msra.mxu0 %v449
        %483 = vmatprep.subr.mxu0 0.0
        %484 = vmatpush2.msra.mxu0 0.0
        %485 = vmatprep.subr.mxu0 0.0
        %486 = vmatpush2.msra.mxu0 0.0
        %487 = vmatprep.subr.mxu0 0.0
        %488 = vmatpush2.msra.mxu0 0.0
        %489 = vmatprep.subr.mxu0 0.0
        %490 = vmatpush2.msra.mxu0 0.0
        %491 = vmatprep.subr.mxu0 0.0
        %492 = vmatpush2.msra.mxu0 0.0
        %493 = vmatprep.subr.mxu0 0.0
        %494 = vmatpush2.msra.mxu0 0.0
        %495 = vmatprep.subr.mxu0 0.0
        %496 = vmatpush2.msra.mxu0 0.0
        %497 = vmatprep.subr.mxu0 0.0
        %498 = vmatpush2.msra.mxu0 0.0
        %499 = vmatprep.subr.mxu0 0.0
        %500 = vmatpush2.msra.mxu0 0.0
        %501 = vmatprep.subr.mxu0 0.0
        %502 = vmatpush2.msra.mxu0 0.0
        %503 = vmatprep.subr.mxu0 0.0
        %504 = vmatpush2.msra.mxu0 0.0
        %505 = vmatprep.subr.mxu0 0.0
        %506 = vmatpush2.msra.mxu0 0.0
        %507 = vmatprep.subr.mxu0 0.0
        %508 = vmatpush2.msra.mxu0 0.0
        %509 = vmatprep.subr.mxu0 0.0
        %510 = vmatpush2.msra.mxu0 0.0
        %511 = vmatprep.subr.mxu0 0.0
        %512 = vmatpush2.msra.mxu0 0.0
        %513 = vmatprep.subr.mxu0 0.0
        %514 = vmatpush2.msra.mxu0 0.0
        %515 = vmatprep.mubr.f32.mxu0 0.0
        %516 = vmatmul.mubr.f32.gmra.mxu0 %v444
        %v517 = vpop.f32.mrf.mxu0
        %v518 = vadd.f32 0.0, %v517
        %v519 = vpop.f32.mrf.mxu0
        %520 = vmatprep.mubr.f32.mxu0 0.0
        %521 = vmatmul.mubr.f32.gmra.mxu0 %v446
        %v522 = vpop.f32.mrf.mxu0
        %v523 = vadd.f32 0.0, %v522
        %v524 = vpop.f32.mrf.mxu0
        %525 = vdwg.mxu0
        %v526 = vadd.f32 %v428, %v518
        %v527 = vadd.f32 %v433, %v523
        %v528 = vld [vmem:[%s3] sm:$0x1]
        %v530 = vlaneseq
        %v531 = vshrl.u32 %v530, 7
        %v532 = vsub.s32 0, %v531
        %v533 = vrot.slane %v528, %v532
        %v535 = vadd.f32 %v526, %v533
        %v536 = vadd.f32 %v527, %v533
        %v537 = vmax.f32 %v535, 0.0
        %v538 = vmax.f32 %v536, 0.0
        %539 = vst [vmem:[%s236] sm:$0xff] %v537
        %540 = vst [vmem:[%s236 + $0x8] sm:$0xff] %v538
        %s541 = sand.u32 %s138, 1
        %s542 = scalar_lea.sflag [#allocation3], %s541
        %s543 = sand.u32 %s138, 1
        %s544 = smul.addr %s543, 16
        %s545 = scalar_lea.vmem [#allocation2], %s544
        // Predicated region
        $region37: #{tpu_custom_call.1} parent=35 // pred_check
          %p546 = pneg %p148
        $region38: #{tpu_custom_call.1} parent=35 // pred_check_branch
          %548 = sbr.rel (%p546) target = $region40
        $region39: #{tpu_custom_call.1} parent=35 // pred_region
          %s549 = smul.u32 2, %s23
          %s551 = ssub.s32 256, 256
          %552 = vsyncadd %s542, %s551
          %s553 = smul.addr %s22, 2
          %s554 = sadd.s32 %s549, %s553
          %s555 = smul.addr %s554, 128
          %s556 = scalar_lea.hbm %s4, %s555
          %s557 = sshll.u32 %s545, 4
          %s558 = int_to_ptr.vmem [resolvable:$true] %s557
          %563 = dma.vmem_to_hbm [thread:$0]  %s558, 256, %s556, %s542, 128, 128, 8
        $region40: #{tpu_custom_call.1} parent=35 // pred_fallthru
          _
      $region36: #{tpu_custom_call.1} parent=5 // pred_fallthru
        _
      %p564 = scmp.le.s32.totalorder 2, %s13
      // Predicated region
      $region41: #{tpu_custom_call.1} parent=5 // pred_check
        %p565 = pneg %p564
      $region42: #{tpu_custom_call.1} parent=5 // pred_check_branch
        %567 = sbr.rel (%p565) target = $region44
      $region43: #{tpu_custom_call.1} parent=5 // pred_region
        %s568 = ssub.s32 %s13, 2
        // Predicated region
        $region45: #{tpu_custom_call.1} parent=43 // pred_check
          %p569 = pneg %p154
        $region46: #{tpu_custom_call.1} parent=43 // pred_check_branch
          %571 = sbr.rel (%p569) target = $region48
        $region47: #{tpu_custom_call.1} parent=43 // pred_region
          %s572 = sand.u32 %s139, 1
          %s573 = scalar_lea.sflag [#allocation3], %s572
          %s574 = sand.u32 %s139, 1
          %s575 = smul.addr %s574, 16
          %s576 = scalar_lea.vmem [#allocation2], %s575
          %577 = dma.done %s573, 256
        $region48: #{tpu_custom_call.1} parent=43 // pred_fallthru
          _
      $region44: #{tpu_custom_call.1} parent=5 // pred_fallthru
        _
    $region6: #{tpu_custom_call.1} parent=1 // loop_footer
      %s17 = sadd.s32 1, %s13
    $region7: #{tpu_custom_call.1} parent=1 // loop_footer_branch
      %12 = sbr.rel target = $region3
    $region8: #{tpu_custom_call.1} parent=1 // loop_exit
      _
    %578 = vsyncpa [#allocation3], 1
    %s579 = scalar_lea.sflag [#allocation3], 1
    %580 = vsyncpa %s579, 1

</llo_original>
